<compile_context>
chip_gen: v7x
topology: tpu7x:2x2x1
jax: 0.10.0
libtpu: 0.0.40
codegen_flags: <defaults>
</compile_context>

<pallas_src>
import math

import jax
import jax.numpy as jnp
from jax.experimental import pallas as pl
from jax.experimental.pallas import tpu as pltpu

EPS = 1e-5  # PyTorch BatchNorm2d default eps


def _transconv_bn_relu_kernel(x_ref, w_ref, shift_ref, o_ref):
    # x_ref:     (TH*W, Cin)         io_dtype
    # w_ref:     (2, Cin, 2*Cout)    io_dtype; dim 0 = output-row parity di, cols = (dj, c),
    #                                BN scale already folded in.  Constant block index ->
    #                                fetched once and kept resident.
    # shift_ref: (2, 1, 2*Cout)      float32; beta + scale*(conv_bias - mean), tiled over dj
    # o_ref:     (TH, 1, W, 2*Cout)  io_dtype; one NHWC slab ordered (h, di, w, (dj, c))
    d = pl.program_id(1)
    y = jnp.dot(x_ref[...], w_ref[d], preferred_element_type=jnp.float32)
    y = jnp.maximum(y + shift_ref[d], 0.0)                    # f32 epilogue (v5e-safe)
    o_ref[...] = y.reshape(o_ref.shape).astype(o_ref.dtype)   # sublane split only (cheap)


def _choose_row_tile(NH, W, Cin, C2, tm, in_item, out_item):
    """Pick TH (rows of the N*H axis per tile); TH*W x-rows form one block."""
    t_align = 8 // math.gcd(W, 8)            # TH multiple of this keeps TH*W % 8 == 0
    TH = max(1, tm // W)
    TH = max(t_align, (TH // t_align) * t_align)
    if TH >= NH:
        TH = NH
        if NH >= 2 * t_align:                # keep >= 2 row tiles so v7x's 2 TCs both get work
            TH = -(-((NH + 1) // 2) // t_align) * t_align

    def footprint(th):                       # double-buffered VMEM bytes
        x_t = th * W * Cin * in_item
        o_t = th * W * C2 * out_item
        wgt = 2 * Cin * C2 * in_item + 2 * C2 * 4
        return 2 * (x_t + o_t + wgt)

    cap = 40 * 1024 * 1024                   # sized against v7x's 64 MiB physical VMEM / TC
    while footprint(TH) > cap and TH > t_align:
        TH = max(t_align, (TH // 2 // t_align) * t_align)
    return TH, footprint(TH)


def trans_conv(x_nchw, weight, bias, gamma, beta, *,
               tm=1024, io_dtype=jnp.float32, channels_last=False):
    """ConvTranspose2d(k=2, s=2) -> BatchNorm2d (training-mode batch stats) -> ReLU.

    x_nchw: (N, Cin, H, W); weight: (Cin, Cout, 2, 2) (nn.ConvTranspose2d layout).
    Returns NCHW (N, Cout, 2H, 2W) by default (PyTorch drop-in), or NHWC (N, 2H, 2W, Cout)
    if channels_last=True, which skips the final layout transpose entirely (preferred when
    chaining TPU-friendly ops).  io_dtype=jnp.bfloat16 halves HBM traffic on v6e/v7x.
    NOTE: best lane density when Cout is a multiple of 64 (store lane width 2*Cout >= 128)
    and Cin >= 128; smaller channel counts are correct but under-fill vregs/MXU.
    """
    N, Cin, H, W = x_nchw.shape
    Cout = weight.shape[1]
    NH = N * H
    M = NH * W
    C2 = 2 * Cout

    # ---- flatten x once; the only other pre-kernel reads of x are the two stats ops -------
    x_flat = jnp.transpose(x_nchw, (0, 2, 3, 1)).reshape(M, Cin).astype(jnp.float32)
    # (Cin, Cout, 2, 2) -> (Cin, di, dj, Cout) -> (Cin, 4*Cout); column = (di*2+dj)*Cout + c
    w_packed = jnp.transpose(weight, (0, 2, 3, 1)).reshape(Cin, 4 * Cout).astype(jnp.float32)
    bias = bias.astype(jnp.float32)
    gamma = gamma.astype(jnp.float32)
    beta = beta.astype(jnp.float32)

    # ---- BatchNorm batch statistics from the tiny Gram matrix (Cin x Cin), in XLA ---------
    # Both stats reads come from the same materialized x_flat; HIGHEST precision protects the
    # centered-Gram (E[x^2] - mean^2 style) cancellation.  A single-pass Pallas G/s reduction
    # would save one more read of x_flat but is a minor term next to the 4x output write.
    hi = jax.lax.Precision.HIGHEST
    s = jnp.sum(x_flat, axis=0)                                # (Cin,)
    G = jnp.matmul(x_flat.T, x_flat, precision=hi)             # (Cin, Cin)
    x_bar = s / M
    Gc = G - M * jnp.outer(x_bar, x_bar)                       # centered Gram
    m_taps = (x_bar @ w_packed).reshape(4, Cout)               # per-tap mean (no bias)
    mean = bias + jnp.mean(m_taps, axis=0)                     # (Cout,)
    d_tap = m_taps + bias[None, :] - mean[None, :]             # (4, Cout)
    q = jnp.einsum('ik,ij,jk->k', w_packed, Gc, w_packed, precision=hi).reshape(4, Cout)
    var = (jnp.sum(q, axis=0) + M * jnp.sum(d_tap * d_tap, axis=0)) / (4.0 * M)
    var = jnp.maximum(var, 0.0)                                # guard rounding-negative var
    # TODO(synk): nn.BatchNorm2d running_mean/running_var buffer updates (training-mode
    # side effect) are not produced; only the forward normalization is reproduced.

    scale = gamma * jax.lax.rsqrt(var + EPS)                   # (Cout,)
    shift = beta + scale * (bias - mean)                       # (Cout,)  conv bias folded in
    # Fold the BN scale into the packed weights; split columns by output-row parity di.
    w_scaled = w_packed * jnp.tile(scale, 4)[None, :]          # (Cin, 4*Cout)
    w_split = jnp.transpose(w_scaled.reshape(Cin, 2, C2), (1, 0, 2)).astype(io_dtype)
    shift_split = jnp.tile(shift, 4).reshape(2, 1, C2).astype(jnp.float32)
    x_in = x_flat.astype(io_dtype)

    in_item = jnp.dtype(io_dtype).itemsize
    TH, fp = _choose_row_tile(NH, W, Cin, C2, tm, in_item, in_item)
    grid = (pl.cdiv(NH, TH), 2)
    vmem_limit = int(max(16 * 1024 * 1024, min(48 * 1024 * 1024, fp + 8 * 1024 * 1024)))

    flops = 2 * M * Cin * 4 * Cout
    bytes_accessed = (M * Cin + 2 * Cin * C2 + M * 2 * C2) * in_item + 8 * C2

    out = pl.pallas_call(
        _transconv_bn_relu_kernel,
        out_shape=jax.ShapeDtypeStruct((NH, 2, W, C2), io_dtype),
        grid=grid,
        in_specs=[
            # x tile index is independent of d -> fetched once per row tile, reused for d=0,1.
            pl.BlockSpec((TH * W, Cin), lambda i, d: (i, 0)),
            # weights / shift: constant block index -> DMA'd once, resident for all steps.
            pl.BlockSpec((2, Cin, C2), lambda i, d: (0, 0, 0)),
            pl.BlockSpec((2, 1, C2), lambda i, d: (0, 0, 0)),
        ],
        out_specs=pl.BlockSpec((TH, 1, W, C2), lambda i, d: (i, d, 0, 0)),
        compiler_params=pltpu.CompilerParams(
            dimension_semantics=("parallel", "arbitrary"),
            vmem_limit_bytes=vmem_limit,
        ),
        cost_estimate=pl.CostEstimate(
            flops=int(flops), transcendentals=0, bytes_accessed=int(bytes_accessed)),
    )(x_in, w_split, shift_split)

    # (N*H, 2, W, 2*Cout) row-major == (n, h, di, w, dj, c): a FREE reshape gives NHWC.
    out_nhwc = out.reshape(N, 2 * H, 2 * W, Cout)
    if channels_last:
        return out_nhwc
    return jnp.transpose(out_nhwc, (0, 3, 1, 2))               # drop-in NCHW (PyTorch layout)


def ref_trans_conv(x, weight, bias, gamma, beta):
    """Pure-JAX reference of the same forward (for sanity check)."""
    # ConvTranspose2d k=2, s=2: out[n,o,2h+di,2w+dj] = sum_c x[n,c,h,w] * W[c,o,di,dj] + b[o]
    y = jnp.einsum('nchw,cokl->nohkwl', x, weight)
    N, Cout, H, _, W, _ = y.shape
    y = y.reshape(N, Cout, 2 * H, 2 * W) + bias[None, :, None, None]
    mean = y.mean(axis=(0, 2, 3), keepdims=True)
    var = ((y - mean) ** 2).mean(axis=(0, 2, 3), keepdims=True)  # biased
    y = (y - mean) * jax.lax.rsqrt(var + EPS)
    y = y * gamma[None, :, None, None] + beta[None, :, None, None]
    return jnp.maximum(y, 0.0)


if __name__ == "__main__":
    N, Cin, Cout, H, W = 2, 4, 8, 16, 16

    key = jax.random.PRNGKey(0)
    kx, kw, kb, kg, kbe = jax.random.split(key, 5)

    x = jax.random.normal(kx, (N, Cin, H, W), dtype=jnp.float32)
    # ConvTranspose2d weight shape: (in_ch, out_ch, kH, kW)
    weight = jax.random.normal(kw, (Cin, Cout, 2, 2), dtype=jnp.float32) * 0.1
    bias = jax.random.normal(kb, (Cout,), dtype=jnp.float32) * 0.1
    gamma = 1.0 + 0.1 * jax.random.normal(kg, (Cout,), dtype=jnp.float32)
    beta = 0.1 * jax.random.normal(kbe, (Cout,), dtype=jnp.float32)

    f = jax.jit(trans_conv, static_argnames=("tm", "io_dtype", "channels_last"))

    ref = jax.block_until_ready(ref_trans_conv(x, weight, bias, gamma, beta))

    # Default path: drop-in PyTorch NCHW output.
    out = jax.block_until_ready(f(x, weight, bias, gamma, beta))
    assert out.shape == (N, Cout, 2 * H, 2 * W)
    max_err = float(jnp.max(jnp.abs(out - ref)))
    assert jnp.allclose(out, ref, rtol=1e-4, atol=1e-4), max_err

    # channels_last path: kernel output consumed directly, zero post-kernel layout passes.
    out_cl = jax.block_until_ready(f(x, weight, bias, gamma, beta, channels_last=True))
    ref_cl = jnp.transpose(ref, (0, 2, 3, 1))
    assert out_cl.shape == (N, 2 * H, 2 * W, Cout)
    assert jnp.allclose(out_cl, ref_cl, rtol=1e-4, atol=1e-4)

    # bf16 I/O path (recommended on v6e/v7x; stats + epilogue stay in f32).
    out_bf = jax.block_until_ready(
        f(x, weight, bias, gamma, beta, io_dtype=jnp.bfloat16, channels_last=True))
    assert jnp.allclose(out_bf.astype(jnp.float32), ref_cl, rtol=5e-2, atol=5e-2)

    print("KERNEL_OK")
</pallas_src>

<mosaic_0001>
module attributes {stable_mosaic.version = 11 : i64} {
  func.func @_transconv_bn_relu_kernel(%arg0: i32, %arg1: i32, %arg2: memref<256x4xf32, #tpu.memory_space<vmem>>, %arg3: memref<2x4x16xf32, #tpu.memory_space<vmem>>, %arg4: memref<2x1x16xf32, #tpu.memory_space<vmem>>, %arg5: memref<16x1x16x16xf32, #tpu.memory_space<vmem>>) attributes {dimension_semantics = [#tpu.dimension_semantics<parallel>, #tpu.dimension_semantics<arbitrary>], iteration_bounds = array<i64: 2, 2>, scalar_prefetch = 0 : i64, scratch_operands = 0 : i64, tpu.core_type = #tpu.core_type<tc>, window_params = [{transform_indices = @transform_0, window_bounds = array<i64: 256, 4>}, {pipeline_mode = #tpu.pipeline_mode<synchronous>, transform_indices = @transform_1, window_bounds = array<i64: 2, 4, 16>}, {pipeline_mode = #tpu.pipeline_mode<synchronous>, transform_indices = @transform_2, window_bounds = array<i64: 2, 1, 16>}, {transform_indices = @transform_3, window_bounds = array<i64: 16, 1, 16, 16>}]} {
    %c0 = arith.constant 0 : index
    %c0_0 = arith.constant 0 : index
    %0 = vector.load %arg2[%c0, %c0_0] : memref<256x4xf32, #tpu.memory_space<vmem>>, vector<256x4xf32>
    %1 = arith.index_cast %arg1 : i32 to index
    %c0_1 = arith.constant 0 : index
    %c0_2 = arith.constant 0 : index
    %2 = vector.load %arg3[%1, %c0_1, %c0_2] : memref<2x4x16xf32, #tpu.memory_space<vmem>>, vector<1x4x16xf32>
    %3 = vector.shape_cast %2 : vector<1x4x16xf32> to vector<4x16xf32>
    %cst = arith.constant dense<0.000000e+00> : vector<256x16xf32>
    %4 = tpu.matmul %0, %3, %cst {dimension_numbers = #tpu.dot_dimension_numbers<[1], [0], [0], [1], [0, 0, 1, 1], [], []>} : vector<256x4xf32>, vector<4x16xf32>, vector<256x16xf32> -> vector<256x16xf32>
    %5 = arith.index_cast %arg1 : i32 to index
    %c0_3 = arith.constant 0 : index
    %c0_4 = arith.constant 0 : index
    %6 = vector.load %arg4[%5, %c0_3, %c0_4] : memref<2x1x16xf32, #tpu.memory_space<vmem>>, vector<1x1x16xf32>
    %7 = vector.shape_cast %6 : vector<1x1x16xf32> to vector<1x16xf32>
    %8 = vector.broadcast %7 : vector<1x16xf32> to vector<256x16xf32>
    %9 = arith.addf %4, %8 : vector<256x16xf32>
    %cst_5 = arith.constant 0.000000e+00 : f32
    %10 = vector.broadcast %cst_5 : f32 to vector<256x16xf32>
    %11 = arith.maximumf %9, %10 : vector<256x16xf32>
    %12 = vector.shape_cast %11 : vector<256x16xf32> to vector<16x1x16x16xf32>
    %c0_6 = arith.constant 0 : index
    %c0_7 = arith.constant 0 : index
    %c0_8 = arith.constant 0 : index
    %c0_9 = arith.constant 0 : index
    %13 = vector.load %arg5[%c0_6, %c0_7, %c0_8, %c0_9] : memref<16x1x16x16xf32, #tpu.memory_space<vmem>>, vector<16x1x16x16xf32>
    tpu.vector_store %arg5[%c0_6, %c0_7, %c0_8, %c0_9], %12 {strides = array<i32>} : memref<16x1x16x16xf32, #tpu.memory_space<vmem>>, vector<16x1x16x16xf32>,
    return
  }
  func.func @transform_0(%arg0: i32, %arg1: i32) -> (i32, i32) {
    %c0_i32 = arith.constant 0 : i32
    %c0_i32_0 = arith.constant 0 : i32
    return %arg0, %c0_i32 : i32, i32
  }
  func.func @transform_1(%arg0: i32, %arg1: i32) -> (i32, i32, i32) {
    %c0_i32 = arith.constant 0 : i32
    %c0_i32_0 = arith.constant 0 : i32
    %c0_i32_1 = arith.constant 0 : i32
    %c0_i32_2 = arith.constant 0 : i32
    return %c0_i32, %c0_i32_0, %c0_i32_1 : i32, i32, i32
  }
  func.func @transform_2(%arg0: i32, %arg1: i32) -> (i32, i32, i32) {
    %c0_i32 = arith.constant 0 : i32
    %c0_i32_0 = arith.constant 0 : i32
    %c0_i32_1 = arith.constant 0 : i32
    %c0_i32_2 = arith.constant 0 : i32
    return %c0_i32, %c0_i32_0, %c0_i32_1 : i32, i32, i32
  }
  func.func @transform_3(%arg0: i32, %arg1: i32) -> (i32, i32, i32, i32) {
    %c0_i32 = arith.constant 0 : i32
    %c0_i32_0 = arith.constant 0 : i32
    %c0_i32_1 = arith.constant 0 : i32
    return %arg0, %arg1, %c0_i32, %c0_i32_0 : i32, i32, i32, i32
  }
}

</mosaic_0001>

<llo_original>
// kernel: trans_conv.1
$region0: #{trans_conv.1}
  #allocation0 [shape = 'u32[]', space=smem, size = 0x4, offset = 0x4, fixed_abs, tag = 'smem constant byte address 0x4 - core index']
  #allocation1 [shape = 'u32[144,128]{1,0:T(1,128)}', space=vmem, size = 0x12000, scoped, tag = 'internal scratch']
  %s0 = inlined_call_operand.vmem [shape: f32[512,4], index: 0, kind: input, shape index: {}]
  %s1 = inlined_call_operand.vmem [shape: f32[2,4,16], index: 1, kind: input, shape index: {}]
  %s2 = inlined_call_operand.vmem [shape: f32[2,1,16], index: 2, kind: input, shape index: {}]
  %s3 = inlined_call_operand.vmem [shape: f32[32,2,16,16], index: 3, kind: output, shape index: {}]
  %s4 = sld [smem:[#allocation0]]
  $region79: #{trans_conv.1} parent=0
    _
  %s6 = ssub.s32 1, %s4
  %s7 = scalar_select 0, %s6, %s4
  $region1: #{trans_conv.1} parent=0
    #allocation2 [shape = 'u8[262144]{0}', space=vmem, size = 0x40000, scoped, tag = 'output window, operand 0']
    loop: start=0, step=1, limit=6
    $region2: #{trans_conv.1} parent=1 // loop_pre_header
      _
    $region3: #{trans_conv.1} parent=1 // loop_header
      %s9 = sphi 0, %s13
      %p10 = scmp.ge.s32.totalorder %s9, 6
      %s16 = sphi 0, %s28
      %s17 = sphi 0, %s24
      %s18 = sphi 0, %s16
      %s19 = sphi 0, %s17
      %s20 = sphi 0, %s18
      %s21 = sphi 0, %s19
      %s31 = sphi 0, %s33
      %s34 = sphi 0, %s31
      %s35 = sphi 0, %s34
      %s51 = sphi 0, %s35
      %s55 = sphi 0, %s55
      %s57 = sphi 0, %s55
      %s58 = sphi 0, %s57
      %s72 = sphi 0, %s58
      %s76 = sphi 0, %s76
      %s78 = sphi 0, %s76
      %s79 = sphi 0, %s78
      %s93 = sphi 0, %s79
      %s101 = sphi 0, %s103
      %s104 = sphi 0, %s101
      %s105 = sphi 0, %s104
      %s121 = sphi 0, %s105
    $region4: #{trans_conv.1} parent=1 // loop_header_branch
      %12 = sbr.rel (%p10) target = $region8
    $region5: #{trans_conv.1} parent=1 // loop_body
      %s14 = ssub.s32 %s9, 1
      %s15 = ssub.s32 %s9, 2
      %s22 = sadd.s32 1, %s17
      %p23 = scmp.ge.s32.totalorder %s22, 2
      %s24 = scalar_select %p23, 0, %s22
      %s25 = sadd.s32 1, %s16
      %s26 = scalar_select %p23, %s25, %s16
      %p27 = scmp.ge.s32.totalorder %s26, 2
      %s28 = scalar_select %p27, 0, %s26
      %s29 = ssub.s32 %s16, %s28
      %p30 = scmp.eq.s32.totalorder %s29, 0
      %s32 = sadd.s32 %s31, 1
      %s33 = scalar_select %p30, %s31, %s32
      %p36 = pneg %p30
      %p37 = scmp.eq.s32.totalorder %s9, 3
      %p38 = por %p36, %p37
      %p39 = scmp.ne.s32.totalorder %s31, %s34
      %p40 = scmp.eq.s32.totalorder %s9, 0
      %p41 = por %p39, %p40
      %p42 = scmp.ne.s32.totalorder %s31, %s34
      %p43 = scmp.eq.s32.totalorder %s14, 3
      %p44 = por %p42, %p43
      %p45 = scmp.ne.s32.totalorder %s34, %s35
      %p46 = scmp.eq.s32.totalorder %s14, 0
      %p47 = por %p45, %p46
      %p48 = scmp.ne.s32.totalorder %s34, %s35
      %p49 = scmp.eq.s32.totalorder %s15, 3
      %p50 = por %p48, %p49
      %p52 = scmp.ne.s32.totalorder %s35, %s51
      %p53 = scmp.eq.s32.totalorder %s15, 0
      %p54 = por %p52, %p53
      %s56 = sadd.s32 %s55, 1
      %p59 = scmp.eq.s32.totalorder %s9, 3
      %p60 = scmp.ne.s32.totalorder %s55, %s57
      %p61 = scmp.eq.s32.totalorder %s9, 0
      %p62 = por %p60, %p61
      %p63 = scmp.ne.s32.totalorder %s55, %s57
      %p64 = scmp.eq.s32.totalorder %s14, 3
      %p65 = por %p63, %p64
      %p66 = scmp.ne.s32.totalorder %s57, %s58
      %p67 = scmp.eq.s32.totalorder %s14, 0
      %p68 = por %p66, %p67
      %p69 = scmp.ne.s32.totalorder %s57, %s58
      %p70 = scmp.eq.s32.totalorder %s15, 3
      %p71 = por %p69, %p70
      %p73 = scmp.ne.s32.totalorder %s58, %s72
      %p74 = scmp.eq.s32.totalorder %s15, 0
      %p75 = por %p73, %p74
      %s77 = sadd.s32 %s76, 1
      %p80 = scmp.eq.s32.totalorder %s9, 3
      %p81 = scmp.ne.s32.totalorder %s76, %s78
      %p82 = scmp.eq.s32.totalorder %s9, 0
      %p83 = por %p81, %p82
      %p84 = scmp.ne.s32.totalorder %s76, %s78
      %p85 = scmp.eq.s32.totalorder %s14, 3
      %p86 = por %p84, %p85
      %p87 = scmp.ne.s32.totalorder %s78, %s79
      %p88 = scmp.eq.s32.totalorder %s14, 0
      %p89 = por %p87, %p88
      %p90 = scmp.ne.s32.totalorder %s78, %s79
      %p91 = scmp.eq.s32.totalorder %s15, 3
      %p92 = por %p90, %p91
      %p94 = scmp.ne.s32.totalorder %s79, %s93
      %p95 = scmp.eq.s32.totalorder %s15, 0
      %p96 = por %p94, %p95
      %s97 = ssub.s32 %s16, %s28
      %s98 = ssub.s32 %s17, %s24
      %s99 = sor.u32 %s97, %s98
      %p100 = scmp.eq.s32.totalorder %s99, 0
      %s102 = sadd.s32 %s101, 1
      %s103 = scalar_select %p100, %s101, %s102
      %p106 = pneg %p100
      %p107 = scmp.eq.s32.totalorder %s9, 3
      %p108 = por %p106, %p107
      %p109 = scmp.ne.s32.totalorder %s101, %s104
      %p110 = scmp.eq.s32.totalorder %s9, 0
      %p111 = por %p109, %p110
      %p112 = scmp.ne.s32.totalorder %s101, %s104
      %p113 = scmp.eq.s32.totalorder %s14, 3
      %p114 = por %p112, %p113
      %p115 = scmp.ne.s32.totalorder %s104, %s105
      %p116 = scmp.eq.s32.totalorder %s14, 0
      %p117 = por %p115, %p116
      %p118 = scmp.ne.s32.totalorder %s104, %s105
      %p119 = scmp.eq.s32.totalorder %s15, 3
      %p120 = por %p118, %p119
      %p122 = scmp.ne.s32.totalorder %s105, %s121
      %p123 = scmp.eq.s32.totalorder %s15, 0
      %p124 = por %p122, %p123
      %p125 = scmp.le.s32.totalorder 1, %s9
      %p126 = scmp.lt.s32.totalorder %s9, 5
      %p127 = pnand %p125, %p126
      %p128 = pneg %p127
      // Predicated region
      $region9: #{trans_conv.1} parent=5 // pred_check
        _
      $region10: #{trans_conv.1} parent=5 // pred_check_branch
        %130 = sbr.rel (%p127) target = $region12
      $region11: #{trans_conv.1} parent=5 // pred_region
        %s131 = ssub.s32 %s9, 1
        // Predicated region
        $region13: #{trans_conv.1} parent=11 // pred_check
          %p132 = pneg %p68
        $region14: #{trans_conv.1} parent=11 // pred_check_branch
          %134 = sbr.rel (%p132) target = $region16
        $region15: #{trans_conv.1} parent=11 // pred_region
          _
        $region16: #{trans_conv.1} parent=11 // pred_fallthru
          _
        // Predicated region
        $region17: #{trans_conv.1} parent=11 // pred_check
          %p135 = pneg %p89
        $region18: #{trans_conv.1} parent=11 // pred_check_branch
          %137 = sbr.rel (%p135) target = $region20
        $region19: #{trans_conv.1} parent=11 // pred_region
          _
        $region20: #{trans_conv.1} parent=11 // pred_fallthru
          _
      $region12: #{trans_conv.1} parent=5 // pred_fallthru
        _
      %p138 = scmp.lt.s32.totalorder %s9, 4
      // Predicated region
      $region21: #{trans_conv.1} parent=5 // pred_check
        %p139 = pneg %p138
      $region22: #{trans_conv.1} parent=5 // pred_check_branch
        %141 = sbr.rel (%p139) target = $region24
      $region23: #{trans_conv.1} parent=5 // pred_region
        // Predicated region
        $region25: #{trans_conv.1} parent=23 // pred_check
          %p142 = pneg %p41
        $region26: #{trans_conv.1} parent=23 // pred_check_branch
          %144 = sbr.rel (%p142) target = $region28
        $region27: #{trans_conv.1} parent=23 // pred_region
          %s145 = smul.u32 32, %s16
          %p146 = scmp.lt.s32.totalorder %s145, 63
          %s147 = scalar_select %p146, %s145, 63
          %s148 = smul.addr %s147, 8
          %s149 = scalar_lea.vmem %s0, %s148
          %s150 = smul.u32 32, %s16
        $region28: #{trans_conv.1} parent=23 // pred_fallthru
          _
      $region24: #{trans_conv.1} parent=5 // pred_fallthru
        _
      %p151 = scmp.le.s32.totalorder 1, %s9
      %p152 = scmp.lt.s32.totalorder %s9, 5
      %p153 = pnand %p151, %p152
      %p154 = pneg %p153
      // Predicated region
      $region29: #{trans_conv.1} parent=5 // pred_check
        _
      $region30: #{trans_conv.1} parent=5 // pred_check_branch
        %156 = sbr.rel (%p153) target = $region32
      $region31: #{trans_conv.1} parent=5 // pred_region
        %s157 = ssub.s32 %s9, 1
        %s158 = smul.u32 32, %s18
        %p159 = scmp.lt.s32.totalorder %s158, 63
        %s160 = scalar_select %p159, %s158, 63
        %s161 = smul.addr %s160, 8
        %s162 = scalar_lea.vmem %s0, %s161
        %p163 = pneg %p47
        %p164 = pneg %p44
        %p165 = pneg %p68
        %p166 = pneg %p65
        %p167 = pneg %p89
        %p168 = pneg %p86
        %p169 = pneg %p117
        %p170 = pneg %p114
        %s171 = sand.u32 %s104, 1
        %s172 = sand.u32 %s104, 1
        %s173 = smul.addr %s172, 256
        %s174 = scalar_lea.vmem [#allocation2], %s173
        %s175 = smul.u32 32, %s18
        %p176 = scmp.lt.s32.totalorder %s175, 63
        %s177 = scalar_select %p176, %s175, 63
        %s178 = smul.addr %s177, 8
        %s179 = scalar_lea.vmem %s0, %s178
        %s180 = smul.u32 32, %s18
        %s181 = smul.u32 16, %s18
        %v182 = vld [vmem:[%s179] sm:$0xff]
        %v183 = vld [vmem:[%s179 + $0x8] sm:$0xff]
        %v184 = vld [vmem:[%s179 + $0x10] sm:$0xff]
        %v185 = vld [vmem:[%s179 + $0x18] sm:$0xff]
        %v186 = vld [vmem:[%s179 + $0x20] sm:$0xff]
        %v187 = vld [vmem:[%s179 + $0x28] sm:$0xff]
        %v188 = vld [vmem:[%s179 + $0x30] sm:$0xff]
        %v189 = vld [vmem:[%s179 + $0x38] sm:$0xff]
        %v190 = vld [vmem:[%s179 + $0x40] sm:$0xff]
        %v191 = vld [vmem:[%s179 + $0x48] sm:$0xff]
        %v192 = vld [vmem:[%s179 + $0x50] sm:$0xff]
        %v193 = vld [vmem:[%s179 + $0x58] sm:$0xff]
        %v194 = vld [vmem:[%s179 + $0x60] sm:$0xff]
        %v195 = vld [vmem:[%s179 + $0x68] sm:$0xff]
        %v196 = vld [vmem:[%s179 + $0x70] sm:$0xff]
        %v197 = vld [vmem:[%s179 + $0x78] sm:$0xff]
        %v198 = vld [vmem:[%s179 + $0x80] sm:$0xff]
        %v199 = vld [vmem:[%s179 + $0x88] sm:$0xff]
        %v200 = vld [vmem:[%s179 + $0x90] sm:$0xff]
        %v201 = vld [vmem:[%s179 + $0x98] sm:$0xff]
        %v202 = vld [vmem:[%s179 + $0xa0] sm:$0xff]
        %v203 = vld [vmem:[%s179 + $0xa8] sm:$0xff]
        %v204 = vld [vmem:[%s179 + $0xb0] sm:$0xff]
        %v205 = vld [vmem:[%s179 + $0xb8] sm:$0xff]
        %v206 = vld [vmem:[%s179 + $0xc0] sm:$0xff]
        %v207 = vld [vmem:[%s179 + $0xc8] sm:$0xff]
        %v208 = vld [vmem:[%s179 + $0xd0] sm:$0xff]
        %v209 = vld [vmem:[%s179 + $0xd8] sm:$0xff]
        %v210 = vld [vmem:[%s179 + $0xe0] sm:$0xff]
        %v211 = vld [vmem:[%s179 + $0xe8] sm:$0xff]
        %v212 = vld [vmem:[%s179 + $0xf0] sm:$0xff]
        %v213 = vld [vmem:[%s179 + $0xf8] sm:$0xff]
        %s214 = smul.u32 %s19, 4
        %s215 = scalar_lea.vmem %s1, %s214
        %v216 = vld [vmem:[%s215] sm:$0xf]
        %s217 = scalar_lea.vmem %s2, %s19
        %v218 = vld [vmem:[%s217] sm:$0x1]
        %v220 = vlaneseq
        %v221 = vshrl.u32 %v220, 7
        %v222 = vsub.s32 0, %v221
        %v223 = vrot.slane %v218, %v222
        %vm225 = vcmask 31744
        %v227 = vsel %vm225, %v182, 0
        %v230 = vsel %vm225, %v183, 0
        %v233 = vsel %vm225, %v184, 0
        %v236 = vsel %vm225, %v185, 0
        %v239 = vsel %vm225, %v186, 0
        %v242 = vsel %vm225, %v187, 0
        %v245 = vsel %vm225, %v188, 0
        %v248 = vsel %vm225, %v189, 0
        %v251 = vsel %vm225, %v190, 0
        %v254 = vsel %vm225, %v191, 0
        %v257 = vsel %vm225, %v192, 0
        %v260 = vsel %vm225, %v193, 0
        %v263 = vsel %vm225, %v194, 0
        %v266 = vsel %vm225, %v195, 0
        %v269 = vsel %vm225, %v196, 0
        %v272 = vsel %vm225, %v197, 0
        %v275 = vsel %vm225, %v198, 0
        %v278 = vsel %vm225, %v199, 0
        %v281 = vsel %vm225, %v200, 0
        %v284 = vsel %vm225, %v201, 0
        %v287 = vsel %vm225, %v202, 0
        %v290 = vsel %vm225, %v203, 0
        %v293 = vsel %vm225, %v204, 0
        %v296 = vsel %vm225, %v205, 0
        %v299 = vsel %vm225, %v206, 0
        %v302 = vsel %vm225, %v207, 0
        %v305 = vsel %vm225, %v208, 0
        %v308 = vsel %vm225, %v209, 0
        %v311 = vsel %vm225, %v210, 0
        %v314 = vsel %vm225, %v211, 0
        %v317 = vsel %vm225, %v212, 0
        %v320 = vsel %vm225, %v213, 0
        %vm322 = vcmask 1043456
        %v324 = vsel %vm322, %v216, 0
        %326 = vmatprep.subr.mxu0 0.0
        %327 = vmatpush1.msra.mxu0 %v324
        %328 = vmatprep.subr.mxu0 0.0
        %329 = vmatpush1.msra.mxu0 0.0
        %330 = vmatprep.subr.mxu0 0.0
        %331 = vmatpush1.msra.mxu0 0.0
        %332 = vmatprep.subr.mxu0 0.0
        %333 = vmatpush1.msra.mxu0 0.0
        %334 = vmatprep.subr.mxu0 0.0
        %335 = vmatpush1.msra.mxu0 0.0
        %336 = vmatprep.subr.mxu0 0.0
        %337 = vmatpush1.msra.mxu0 0.0
        %338 = vmatprep.subr.mxu0 0.0
        %339 = vmatpush1.msra.mxu0 0.0
        %340 = vmatprep.subr.mxu0 0.0
        %341 = vmatpush1.msra.mxu0 0.0
        %342 = vmatprep.subr.mxu0 0.0
        %343 = vmatpush1.msra.mxu0 0.0
        %344 = vmatprep.subr.mxu0 0.0
        %345 = vmatpush1.msra.mxu0 0.0
        %346 = vmatprep.subr.mxu0 0.0
        %347 = vmatpush1.msra.mxu0 0.0
        %348 = vmatprep.subr.mxu0 0.0
        %349 = vmatpush1.msra.mxu0 0.0
        %350 = vmatprep.subr.mxu0 0.0
        %351 = vmatpush1.msra.mxu0 0.0
        %352 = vmatprep.subr.mxu0 0.0
        %353 = vmatpush1.msra.mxu0 0.0
        %354 = vmatprep.subr.mxu0 0.0
        %355 = vmatpush1.msra.mxu0 0.0
        %356 = vmatprep.subr.mxu0 0.0
        %357 = vmatpush1.msra.mxu0 0.0
        %358 = vmatprep.subr.mxu0 0.0
        %359 = vmatpush1.msra.mxu0 0.0
        %360 = vmatprep.subr.mxu0 0.0
        %361 = vmatpush1.msra.mxu0 0.0
        %362 = vmatprep.subr.mxu0 0.0
        %363 = vmatpush1.msra.mxu0 0.0
        %364 = vmatprep.subr.mxu0 0.0
        %365 = vmatpush1.msra.mxu0 0.0
        %366 = vmatprep.subr.mxu0 0.0
        %367 = vmatpush1.msra.mxu0 0.0
        %368 = vmatprep.subr.mxu0 0.0
        %369 = vmatpush1.msra.mxu0 0.0
        %370 = vmatprep.subr.mxu0 0.0
        %371 = vmatpush1.msra.mxu0 0.0
        %372 = vmatprep.subr.mxu0 0.0
        %373 = vmatpush1.msra.mxu0 0.0
        %374 = vmatprep.subr.mxu0 0.0
        %375 = vmatpush1.msra.mxu0 0.0
        %376 = vmatprep.subr.mxu0 0.0
        %377 = vmatpush1.msra.mxu0 0.0
        %378 = vmatprep.subr.mxu0 0.0
        %379 = vmatpush1.msra.mxu0 0.0
        %380 = vmatprep.subr.mxu0 0.0
        %381 = vmatpush1.msra.mxu0 0.0
        %382 = vmatprep.subr.mxu0 0.0
        %383 = vmatpush1.msra.mxu0 0.0
        %384 = vmatprep.subr.mxu0 0.0
        %385 = vmatpush1.msra.mxu0 0.0
        %386 = vmatprep.subr.mxu0 0.0
        %387 = vmatpush1.msra.mxu0 0.0
        %388 = vmatprep.subr.mxu0 0.0
        %389 = vmatpush1.msra.mxu0 0.0
        %390 = vmatprep.mubr.f32.mxu0 0.0
        %391 = vmatmul.mubr.f32.gmra.mrb[0].mxu0 %v227
        %v392 = vpop.f32.mrb[0].mxu0
        %v393 = vadd.f32 %v223, %v392
        %v394 = vpop.f32.mrb[0].mxu0
        %395 = vmatprep.mubr.f32.mxu0 0.0
        %396 = vmatmul.mubr.f32.gmra.mrb[0].mxu0 %v230
        %v397 = vpop.f32.mrb[0].mxu0
        %v398 = vadd.f32 %v223, %v397
        %v399 = vpop.f32.mrb[0].mxu0
        %400 = vmatprep.mubr.f32.mxu0 0.0
        %401 = vmatmul.mubr.f32.gmra.mrb[0].mxu0 %v233
        %v402 = vpop.f32.mrb[0].mxu0
        %v403 = vadd.f32 %v223, %v402
        %v404 = vpop.f32.mrb[0].mxu0
        %405 = vmatprep.mubr.f32.mxu0 0.0
        %406 = vmatmul.mubr.f32.gmra.mrb[0].mxu0 %v236
        %v407 = vpop.f32.mrb[0].mxu0
        %v408 = vadd.f32 %v223, %v407
        %v409 = vpop.f32.mrb[0].mxu0
        %410 = vmatprep.mubr.f32.mxu0 0.0
        %411 = vmatmul.mubr.f32.gmra.mrb[0].mxu0 %v239
        %v412 = vpop.f32.mrb[0].mxu0
        %v413 = vadd.f32 %v223, %v412
        %v414 = vpop.f32.mrb[0].mxu0
        %415 = vmatprep.mubr.f32.mxu0 0.0
        %416 = vmatmul.mubr.f32.gmra.mrb[0].mxu0 %v242
        %v417 = vpop.f32.mrb[0].mxu0
        %v418 = vadd.f32 %v223, %v417
        %v419 = vpop.f32.mrb[0].mxu0
        %420 = vmatprep.mubr.f32.mxu0 0.0
        %421 = vmatmul.mubr.f32.gmra.mrb[0].mxu0 %v245
        %v422 = vpop.f32.mrb[0].mxu0
        %v423 = vadd.f32 %v223, %v422
        %v424 = vpop.f32.mrb[0].mxu0
        %425 = vmatprep.mubr.f32.mxu0 0.0
        %426 = vmatmul.mubr.f32.gmra.mrb[0].mxu0 %v248
        %v427 = vpop.f32.mrb[0].mxu0
        %v428 = vadd.f32 %v223, %v427
        %v429 = vpop.f32.mrb[0].mxu0
        %430 = vmatprep.mubr.f32.mxu0 0.0
        %431 = vmatmul.mubr.f32.gmra.mrb[0].mxu0 %v251
        %v432 = vpop.f32.mrb[0].mxu0
        %v433 = vadd.f32 %v223, %v432
        %v434 = vpop.f32.mrb[0].mxu0
        %435 = vmatprep.mubr.f32.mxu0 0.0
        %436 = vmatmul.mubr.f32.gmra.mrb[0].mxu0 %v254
        %v437 = vpop.f32.mrb[0].mxu0
        %v438 = vadd.f32 %v223, %v437
        %v439 = vpop.f32.mrb[0].mxu0
        %440 = vmatprep.mubr.f32.mxu0 0.0
        %441 = vmatmul.mubr.f32.gmra.mrb[0].mxu0 %v257
        %v442 = vpop.f32.mrb[0].mxu0
        %v443 = vadd.f32 %v223, %v442
        %v444 = vpop.f32.mrb[0].mxu0
        %445 = vmatprep.mubr.f32.mxu0 0.0
        %446 = vmatmul.mubr.f32.gmra.mrb[0].mxu0 %v260
        %v447 = vpop.f32.mrb[0].mxu0
        %v448 = vadd.f32 %v223, %v447
        %v449 = vpop.f32.mrb[0].mxu0
        %450 = vmatprep.mubr.f32.mxu0 0.0
        %451 = vmatmul.mubr.f32.gmra.mrb[0].mxu0 %v263
        %v452 = vpop.f32.mrb[0].mxu0
        %v453 = vadd.f32 %v223, %v452
        %v454 = vpop.f32.mrb[0].mxu0
        %455 = vmatprep.mubr.f32.mxu0 0.0
        %456 = vmatmul.mubr.f32.gmra.mrb[0].mxu0 %v266
        %v457 = vpop.f32.mrb[0].mxu0
        %v458 = vadd.f32 %v223, %v457
        %v459 = vpop.f32.mrb[0].mxu0
        %460 = vmatprep.mubr.f32.mxu0 0.0
        %461 = vmatmul.mubr.f32.gmra.mrb[0].mxu0 %v269
        %v462 = vpop.f32.mrb[0].mxu0
        %v463 = vadd.f32 %v223, %v462
        %v464 = vpop.f32.mrb[0].mxu0
        %465 = vmatprep.mubr.f32.mxu0 0.0
        %466 = vmatmul.mubr.f32.gmra.mrb[0].mxu0 %v272
        %v467 = vpop.f32.mrb[0].mxu0
        %v468 = vadd.f32 %v223, %v467
        %v469 = vpop.f32.mrb[0].mxu0
        %470 = vmatprep.mubr.f32.mxu0 0.0
        %471 = vmatmul.mubr.f32.gmra.mrb[0].mxu0 %v275
        %v472 = vpop.f32.mrb[0].mxu0
        %v473 = vadd.f32 %v223, %v472
        %v474 = vpop.f32.mrb[0].mxu0
        %475 = vmatprep.mubr.f32.mxu0 0.0
        %476 = vmatmul.mubr.f32.gmra.mrb[0].mxu0 %v278
        %v477 = vpop.f32.mrb[0].mxu0
        %v478 = vadd.f32 %v223, %v477
        %v479 = vpop.f32.mrb[0].mxu0
        %480 = vmatprep.mubr.f32.mxu0 0.0
        %481 = vmatmul.mubr.f32.gmra.mrb[0].mxu0 %v281
        %v482 = vpop.f32.mrb[0].mxu0
        %v483 = vadd.f32 %v223, %v482
        %v484 = vpop.f32.mrb[0].mxu0
        %485 = vmatprep.mubr.f32.mxu0 0.0
        %486 = vmatmul.mubr.f32.gmra.mrb[0].mxu0 %v284
        %v487 = vpop.f32.mrb[0].mxu0
        %v488 = vadd.f32 %v223, %v487
        %v489 = vpop.f32.mrb[0].mxu0
        %490 = vmatprep.mubr.f32.mxu0 0.0
        %491 = vmatmul.mubr.f32.gmra.mrb[0].mxu0 %v287
        %v492 = vpop.f32.mrb[0].mxu0
        %v493 = vadd.f32 %v223, %v492
        %v494 = vpop.f32.mrb[0].mxu0
        %495 = vmatprep.mubr.f32.mxu0 0.0
        %496 = vmatmul.mubr.f32.gmra.mrb[0].mxu0 %v290
        %v497 = vpop.f32.mrb[0].mxu0
        %v498 = vadd.f32 %v223, %v497
        %v499 = vpop.f32.mrb[0].mxu0
        %500 = vmatprep.mubr.f32.mxu0 0.0
        %501 = vmatmul.mubr.f32.gmra.mrb[0].mxu0 %v293
        %v502 = vpop.f32.mrb[0].mxu0
        %v503 = vadd.f32 %v223, %v502
        %v504 = vpop.f32.mrb[0].mxu0
        %505 = vmatprep.mubr.f32.mxu0 0.0
        %506 = vmatmul.mubr.f32.gmra.mrb[0].mxu0 %v296
        %v507 = vpop.f32.mrb[0].mxu0
        %v508 = vadd.f32 %v223, %v507
        %v509 = vpop.f32.mrb[0].mxu0
        %510 = vmatprep.mubr.f32.mxu0 0.0
        %511 = vmatmul.mubr.f32.gmra.mrb[0].mxu0 %v299
        %v512 = vpop.f32.mrb[0].mxu0
        %v513 = vadd.f32 %v223, %v512
        %v514 = vpop.f32.mrb[0].mxu0
        %515 = vmatprep.mubr.f32.mxu0 0.0
        %516 = vmatmul.mubr.f32.gmra.mrb[0].mxu0 %v302
        %v517 = vpop.f32.mrb[0].mxu0
        %v518 = vadd.f32 %v223, %v517
        %v519 = vpop.f32.mrb[0].mxu0
        %520 = vmatprep.mubr.f32.mxu0 0.0
        %521 = vmatmul.mubr.f32.gmra.mrb[0].mxu0 %v305
        %v522 = vpop.f32.mrb[0].mxu0
        %v523 = vadd.f32 %v223, %v522
        %v524 = vpop.f32.mrb[0].mxu0
        %525 = vmatprep.mubr.f32.mxu0 0.0
        %526 = vmatmul.mubr.f32.gmra.mrb[0].mxu0 %v308
        %v527 = vpop.f32.mrb[0].mxu0
        %v528 = vadd.f32 %v223, %v527
        %v529 = vpop.f32.mrb[0].mxu0
        %530 = vmatprep.mubr.f32.mxu0 0.0
        %531 = vmatmul.mubr.f32.gmra.mrb[0].mxu0 %v311
        %v532 = vpop.f32.mrb[0].mxu0
        %v533 = vadd.f32 %v223, %v532
        %v534 = vpop.f32.mrb[0].mxu0
        %535 = vmatprep.mubr.f32.mxu0 0.0
        %536 = vmatmul.mubr.f32.gmra.mrb[0].mxu0 %v314
        %v537 = vpop.f32.mrb[0].mxu0
        %v538 = vadd.f32 %v223, %v537
        %v539 = vpop.f32.mrb[0].mxu0
        %540 = vmatprep.mubr.f32.mxu0 0.0
        %541 = vmatmul.mubr.f32.gmra.mrb[0].mxu0 %v317
        %v542 = vpop.f32.mrb[0].mxu0
        %v543 = vadd.f32 %v223, %v542
        %v544 = vpop.f32.mrb[0].mxu0
        %545 = vmatprep.mubr.f32.mxu0 0.0
        %546 = vmatmul.mubr.f32.gmra.mrb[0].mxu0 %v320
        %v547 = vpop.f32.mrb[0].mxu0
        %v548 = vadd.f32 %v223, %v547
        %v549 = vpop.f32.mrb[0].mxu0
        %550 = vdwg.mxu0
        %v551 = vmax.f32 %v393, 0.0
        %v552 = vmax.f32 %v398, 0.0
        %v553 = vmax.f32 %v403, 0.0
        %v554 = vmax.f32 %v408, 0.0
        %v555 = vmax.f32 %v413, 0.0
        %v556 = vmax.f32 %v418, 0.0
        %v557 = vmax.f32 %v423, 0.0
        %v558 = vmax.f32 %v428, 0.0
        %v559 = vmax.f32 %v433, 0.0
        %v560 = vmax.f32 %v438, 0.0
        %v561 = vmax.f32 %v443, 0.0
        %v562 = vmax.f32 %v448, 0.0
        %v563 = vmax.f32 %v453, 0.0
        %v564 = vmax.f32 %v458, 0.0
        %v565 = vmax.f32 %v463, 0.0
        %v566 = vmax.f32 %v468, 0.0
        %v567 = vmax.f32 %v473, 0.0
        %v568 = vmax.f32 %v478, 0.0
        %v569 = vmax.f32 %v483, 0.0
        %v570 = vmax.f32 %v488, 0.0
        %v571 = vmax.f32 %v493, 0.0
        %v572 = vmax.f32 %v498, 0.0
        %v573 = vmax.f32 %v503, 0.0
        %v574 = vmax.f32 %v508, 0.0
        %v575 = vmax.f32 %v513, 0.0
        %v576 = vmax.f32 %v518, 0.0
        %v577 = vmax.f32 %v523, 0.0
        %v578 = vmax.f32 %v528, 0.0
        %v579 = vmax.f32 %v533, 0.0
        %v580 = vmax.f32 %v538, 0.0
        %v581 = vmax.f32 %v543, 0.0
        %v582 = vmax.f32 %v548, 0.0
        %vm583 = vcmask 130048
        %584 = vst.msk [vmem:[%s174] sm:$0xff] %vm583, %v551
        %585 = vst.msk [vmem:[%s174 + $0x8] sm:$0xff] %vm583, %v552
        %586 = vst.msk [vmem:[%s174 + $0x10] sm:$0xff] %vm583, %v553
        %587 = vst.msk [vmem:[%s174 + $0x18] sm:$0xff] %vm583, %v554
        %588 = vst.msk [vmem:[%s174 + $0x20] sm:$0xff] %vm583, %v555
        %589 = vst.msk [vmem:[%s174 + $0x28] sm:$0xff] %vm583, %v556
        %590 = vst.msk [vmem:[%s174 + $0x30] sm:$0xff] %vm583, %v557
        %591 = vst.msk [vmem:[%s174 + $0x38] sm:$0xff] %vm583, %v558
        %592 = vst.msk [vmem:[%s174 + $0x40] sm:$0xff] %vm583, %v559
        %593 = vst.msk [vmem:[%s174 + $0x48] sm:$0xff] %vm583, %v560
        %594 = vst.msk [vmem:[%s174 + $0x50] sm:$0xff] %vm583, %v561
        %595 = vst.msk [vmem:[%s174 + $0x58] sm:$0xff] %vm583, %v562
        %596 = vst.msk [vmem:[%s174 + $0x60] sm:$0xff] %vm583, %v563
        %597 = vst.msk [vmem:[%s174 + $0x68] sm:$0xff] %vm583, %v564
        %598 = vst.msk [vmem:[%s174 + $0x70] sm:$0xff] %vm583, %v565
        %599 = vst.msk [vmem:[%s174 + $0x78] sm:$0xff] %vm583, %v566
        %600 = vst.msk [vmem:[%s174 + $0x80] sm:$0xff] %vm583, %v567
        %601 = vst.msk [vmem:[%s174 + $0x88] sm:$0xff] %vm583, %v568
        %602 = vst.msk [vmem:[%s174 + $0x90] sm:$0xff] %vm583, %v569
        %603 = vst.msk [vmem:[%s174 + $0x98] sm:$0xff] %vm583, %v570
        %604 = vst.msk [vmem:[%s174 + $0xa0] sm:$0xff] %vm583, %v571
        %605 = vst.msk [vmem:[%s174 + $0xa8] sm:$0xff] %vm583, %v572
        %606 = vst.msk [vmem:[%s174 + $0xb0] sm:$0xff] %vm583, %v573
        %607 = vst.msk [vmem:[%s174 + $0xb8] sm:$0xff] %vm583, %v574
        %608 = vst.msk [vmem:[%s174 + $0xc0] sm:$0xff] %vm583, %v575
        %609 = vst.msk [vmem:[%s174 + $0xc8] sm:$0xff] %vm583, %v576
        %610 = vst.msk [vmem:[%s174 + $0xd0] sm:$0xff] %vm583, %v577
        %611 = vst.msk [vmem:[%s174 + $0xd8] sm:$0xff] %vm583, %v578
        %612 = vst.msk [vmem:[%s174 + $0xe0] sm:$0xff] %vm583, %v579
        %613 = vst.msk [vmem:[%s174 + $0xe8] sm:$0xff] %vm583, %v580
        %614 = vst.msk [vmem:[%s174 + $0xf0] sm:$0xff] %vm583, %v581
        %615 = vst.msk [vmem:[%s174 + $0xf8] sm:$0xff] %vm583, %v582
        %s616 = sand.u32 %s104, 1
        %s617 = sand.u32 %s104, 1
        %s618 = smul.addr %s617, 256
        %s619 = scalar_lea.vmem [#allocation2], %s618
        // Predicated region
        $region33: #{trans_conv.1} parent=31 // pred_check
          %p620 = pneg %p114
        $region34: #{trans_conv.1} parent=31 // pred_check_branch
          %622 = sbr.rel (%p620) target = $region36
        $region35: #{trans_conv.1} parent=31 // pred_region
          %s623 = smul.u32 16, %s18
          %s624 = smul.addr %s19, 2
          %s625 = smul.addr %s623, 4
          %s626 = sadd.s32 %s624, %s625
          %s627 = smul.addr %s626, 8
          %s628 = scalar_lea.vmem %s3, %s627
          // Predicated region
          $region37: #{trans_conv.1} parent=35 // pred_check
            _
          $region38: #{trans_conv.1} parent=35 // pred_check_branch
            %630 = sbr.rel (0) target = $region40
          $region39: #{trans_conv.1} parent=35 // pred_region
            // Predicated region
            $region41: #{trans_conv.1} parent=39 // pred_check
              _
            $region42: #{trans_conv.1} parent=39 // pred_check_branch
              %632 = sbr.rel (0) target = $region44
            $region43: #{trans_conv.1} parent=39 // pred_region
              // Predicated region
              $region56: #{trans_conv.1} parent=43 // pred_check
                _
              $region57: #{trans_conv.1} parent=43 // pred_check_branch
                %709 = sbr.rel (0) target = $region59
              $region58: #{trans_conv.1} parent=43 // pred_region
                loop: start=0, step=1, limit=1
                $region60: #{trans_conv.1} parent=58 // loop_pre_header
                  _
                $region61: #{trans_conv.1} parent=58 // loop_header
                  %s711 = sphi 0, %s715
                  %p712 = scmp.ge.s32.totalorder %s711, 1
                  %s716 = sphi %s619, %s619
                  %s717 = sphi %s628, %s628
                $region62: #{trans_conv.1} parent=58 // loop_header_branch
                  %714 = sbr.rel (%p712) target = $region66
                $region63: #{trans_conv.1} parent=58 // loop_body
                  %v718 = vld [vmem:[%s716] sm:$0xff]
                  %719 = vst [vmem:[%s717] sm:$0xff] %v718
                  %v720 = vld [vmem:[%s716 + $0x8] sm:$0xff]
                  %721 = vst [vmem:[%s717 + $0x8] sm:$0xff] %v720
                  %v722 = vld [vmem:[%s716 + $0x10] sm:$0xff]
                  %723 = vst [vmem:[%s717 + $0x20] sm:$0xff] %v722
                  %v724 = vld [vmem:[%s716 + $0x18] sm:$0xff]
                  %725 = vst [vmem:[%s717 + $0x28] sm:$0xff] %v724
                  %v726 = vld [vmem:[%s716 + $0x20] sm:$0xff]
                  %727 = vst [vmem:[%s717 + $0x40] sm:$0xff] %v726
                  %v728 = vld [vmem:[%s716 + $0x28] sm:$0xff]
                  %729 = vst [vmem:[%s717 + $0x48] sm:$0xff] %v728
                  %v730 = vld [vmem:[%s716 + $0x30] sm:$0xff]
                  %731 = vst [vmem:[%s717 + $0x60] sm:$0xff] %v730
                  %v732 = vld [vmem:[%s716 + $0x38] sm:$0xff]
                  %733 = vst [vmem:[%s717 + $0x68] sm:$0xff] %v732
                  %v734 = vld [vmem:[%s716 + $0x40] sm:$0xff]
                  %735 = vst [vmem:[%s717 + $0x80] sm:$0xff] %v734
                  %v736 = vld [vmem:[%s716 + $0x48] sm:$0xff]
                  %737 = vst [vmem:[%s717 + $0x88] sm:$0xff] %v736
                  %v738 = vld [vmem:[%s716 + $0x50] sm:$0xff]
                  %739 = vst [vmem:[%s717 + $0xa0] sm:$0xff] %v738
                  %v740 = vld [vmem:[%s716 + $0x58] sm:$0xff]
                  %741 = vst [vmem:[%s717 + $0xa8] sm:$0xff] %v740
                  %v742 = vld [vmem:[%s716 + $0x60] sm:$0xff]
                  %743 = vst [vmem:[%s717 + $0xc0] sm:$0xff] %v742
                  %v744 = vld [vmem:[%s716 + $0x68] sm:$0xff]
                  %745 = vst [vmem:[%s717 + $0xc8] sm:$0xff] %v744
                  %v746 = vld [vmem:[%s716 + $0x70] sm:$0xff]
                  %747 = vst [vmem:[%s717 + $0xe0] sm:$0xff] %v746
                  %v748 = vld [vmem:[%s716 + $0x78] sm:$0xff]
                  %749 = vst [vmem:[%s717 + $0xe8] sm:$0xff] %v748
                  %v750 = vld [vmem:[%s716 + $0x80] sm:$0xff]
                  %751 = vst [vmem:[%s717 + $0x100] sm:$0xff] %v750
                  %v752 = vld [vmem:[%s716 + $0x88] sm:$0xff]
                  %753 = vst [vmem:[%s717 + $0x108] sm:$0xff] %v752
                  %v754 = vld [vmem:[%s716 + $0x90] sm:$0xff]
                  %755 = vst [vmem:[%s717 + $0x120] sm:$0xff] %v754
                  %v756 = vld [vmem:[%s716 + $0x98] sm:$0xff]
                  %757 = vst [vmem:[%s717 + $0x128] sm:$0xff] %v756
                  %v758 = vld [vmem:[%s716 + $0xa0] sm:$0xff]
                  %759 = vst [vmem:[%s717 + $0x140] sm:$0xff] %v758
                  %v760 = vld [vmem:[%s716 + $0xa8] sm:$0xff]
                  %761 = vst [vmem:[%s717 + $0x148] sm:$0xff] %v760
                  %v762 = vld [vmem:[%s716 + $0xb0] sm:$0xff]
                  %763 = vst [vmem:[%s717 + $0x160] sm:$0xff] %v762
                  %v764 = vld [vmem:[%s716 + $0xb8] sm:$0xff]
                  %765 = vst [vmem:[%s717 + $0x168] sm:$0xff] %v764
                  %v766 = vld [vmem:[%s716 + $0xc0] sm:$0xff]
                  %767 = vst [vmem:[%s717 + $0x180] sm:$0xff] %v766
                  %v768 = vld [vmem:[%s716 + $0xc8] sm:$0xff]
                  %769 = vst [vmem:[%s717 + $0x188] sm:$0xff] %v768
                  %v770 = vld [vmem:[%s716 + $0xd0] sm:$0xff]
                  %771 = vst [vmem:[%s717 + $0x1a0] sm:$0xff] %v770
                  %v772 = vld [vmem:[%s716 + $0xd8] sm:$0xff]
                  %773 = vst [vmem:[%s717 + $0x1a8] sm:$0xff] %v772
                  %v774 = vld [vmem:[%s716 + $0xe0] sm:$0xff]
                  %775 = vst [vmem:[%s717 + $0x1c0] sm:$0xff] %v774
                  %v776 = vld [vmem:[%s716 + $0xe8] sm:$0xff]
                  %777 = vst [vmem:[%s717 + $0x1c8] sm:$0xff] %v776
                  %v778 = vld [vmem:[%s716 + $0xf0] sm:$0xff]
                  %779 = vst [vmem:[%s717 + $0x1e0] sm:$0xff] %v778
                  %v780 = vld [vmem:[%s716 + $0xf8] sm:$0xff]
                  %781 = vst [vmem:[%s717 + $0x1e8] sm:$0xff] %v780
                $region64: #{trans_conv.1} parent=58 // loop_footer
                  %s715 = sadd.s32 1, %s711
                $region65: #{trans_conv.1} parent=58 // loop_footer_branch
                  %710 = sbr.rel target = $region61
                $region66: #{trans_conv.1} parent=58 // loop_exit
                  _
              $region59: #{trans_conv.1} parent=43 // pred_fallthru
                _
              // Predicated region
              $region67: #{trans_conv.1} parent=43 // pred_check
                _
              $region68: #{trans_conv.1} parent=43 // pred_check_branch
                %783 = sbr.rel target = $region70
              $region69: #{trans_conv.1} parent=43 // pred_region
                _
              $region70: #{trans_conv.1} parent=43 // pred_fallthru
                _
            $region44: #{trans_conv.1} parent=39 // pred_fallthru
              _
            // Predicated region
            $region45: #{trans_conv.1} parent=39 // pred_check
              _
            $region46: #{trans_conv.1} parent=39 // pred_check_branch
              %634 = sbr.rel target = $region48
            $region47: #{trans_conv.1} parent=39 // pred_region
              loop: start=0, step=1, limit=1
              $region49: #{trans_conv.1} parent=47 // loop_pre_header
                _
              $region50: #{trans_conv.1} parent=47 // loop_header
                %s637 = sphi 0, %s641
                %p638 = scmp.ge.s32.totalorder %s637, 1
                %s642 = sphi %s619, %s619
                %s643 = sphi %s628, %s628
              $region51: #{trans_conv.1} parent=47 // loop_header_branch
                %640 = sbr.rel (%p638) target = $region55
              $region52: #{trans_conv.1} parent=47 // loop_body
                %v644 = vld [vmem:[%s642] sm:$0xff]
                %645 = vst [vmem:[%s643] sm:$0xff] %v644
                %v646 = vld [vmem:[%s642 + $0x8] sm:$0xff]
                %647 = vst [vmem:[%s643 + $0x8] sm:$0xff] %v646
                %v648 = vld [vmem:[%s642 + $0x10] sm:$0xff]
                %649 = vst [vmem:[%s643 + $0x20] sm:$0xff] %v648
                %v650 = vld [vmem:[%s642 + $0x18] sm:$0xff]
                %651 = vst [vmem:[%s643 + $0x28] sm:$0xff] %v650
                %v652 = vld [vmem:[%s642 + $0x20] sm:$0xff]
                %653 = vst [vmem:[%s643 + $0x40] sm:$0xff] %v652
                %v654 = vld [vmem:[%s642 + $0x28] sm:$0xff]
                %655 = vst [vmem:[%s643 + $0x48] sm:$0xff] %v654
                %v656 = vld [vmem:[%s642 + $0x30] sm:$0xff]
                %657 = vst [vmem:[%s643 + $0x60] sm:$0xff] %v656
                %v658 = vld [vmem:[%s642 + $0x38] sm:$0xff]
                %659 = vst [vmem:[%s643 + $0x68] sm:$0xff] %v658
                %v660 = vld [vmem:[%s642 + $0x40] sm:$0xff]
                %661 = vst [vmem:[%s643 + $0x80] sm:$0xff] %v660
                %v662 = vld [vmem:[%s642 + $0x48] sm:$0xff]
                %663 = vst [vmem:[%s643 + $0x88] sm:$0xff] %v662
                %v664 = vld [vmem:[%s642 + $0x50] sm:$0xff]
                %665 = vst [vmem:[%s643 + $0xa0] sm:$0xff] %v664
                %v666 = vld [vmem:[%s642 + $0x58] sm:$0xff]
                %667 = vst [vmem:[%s643 + $0xa8] sm:$0xff] %v666
                %v668 = vld [vmem:[%s642 + $0x60] sm:$0xff]
                %669 = vst [vmem:[%s643 + $0xc0] sm:$0xff] %v668
                %v670 = vld [vmem:[%s642 + $0x68] sm:$0xff]
                %671 = vst [vmem:[%s643 + $0xc8] sm:$0xff] %v670
                %v672 = vld [vmem:[%s642 + $0x70] sm:$0xff]
                %673 = vst [vmem:[%s643 + $0xe0] sm:$0xff] %v672
                %v674 = vld [vmem:[%s642 + $0x78] sm:$0xff]
                %675 = vst [vmem:[%s643 + $0xe8] sm:$0xff] %v674
                %v676 = vld [vmem:[%s642 + $0x80] sm:$0xff]
                %677 = vst [vmem:[%s643 + $0x100] sm:$0xff] %v676
                %v678 = vld [vmem:[%s642 + $0x88] sm:$0xff]
                %679 = vst [vmem:[%s643 + $0x108] sm:$0xff] %v678
                %v680 = vld [vmem:[%s642 + $0x90] sm:$0xff]
                %681 = vst [vmem:[%s643 + $0x120] sm:$0xff] %v680
                %v682 = vld [vmem:[%s642 + $0x98] sm:$0xff]
                %683 = vst [vmem:[%s643 + $0x128] sm:$0xff] %v682
                %v684 = vld [vmem:[%s642 + $0xa0] sm:$0xff]
                %685 = vst [vmem:[%s643 + $0x140] sm:$0xff] %v684
                %v686 = vld [vmem:[%s642 + $0xa8] sm:$0xff]
                %687 = vst [vmem:[%s643 + $0x148] sm:$0xff] %v686
                %v688 = vld [vmem:[%s642 + $0xb0] sm:$0xff]
                %689 = vst [vmem:[%s643 + $0x160] sm:$0xff] %v688
                %v690 = vld [vmem:[%s642 + $0xb8] sm:$0xff]
                %691 = vst [vmem:[%s643 + $0x168] sm:$0xff] %v690
                %v692 = vld [vmem:[%s642 + $0xc0] sm:$0xff]
                %693 = vst [vmem:[%s643 + $0x180] sm:$0xff] %v692
                %v694 = vld [vmem:[%s642 + $0xc8] sm:$0xff]
                %695 = vst [vmem:[%s643 + $0x188] sm:$0xff] %v694
                %v696 = vld [vmem:[%s642 + $0xd0] sm:$0xff]
                %697 = vst [vmem:[%s643 + $0x1a0] sm:$0xff] %v696
                %v698 = vld [vmem:[%s642 + $0xd8] sm:$0xff]
                %699 = vst [vmem:[%s643 + $0x1a8] sm:$0xff] %v698
                %v700 = vld [vmem:[%s642 + $0xe0] sm:$0xff]
                %701 = vst [vmem:[%s643 + $0x1c0] sm:$0xff] %v700
                %v702 = vld [vmem:[%s642 + $0xe8] sm:$0xff]
                %703 = vst [vmem:[%s643 + $0x1c8] sm:$0xff] %v702
                %v704 = vld [vmem:[%s642 + $0xf0] sm:$0xff]
                %705 = vst [vmem:[%s643 + $0x1e0] sm:$0xff] %v704
                %v706 = vld [vmem:[%s642 + $0xf8] sm:$0xff]
                %707 = vst [vmem:[%s643 + $0x1e8] sm:$0xff] %v706
              $region53: #{trans_conv.1} parent=47 // loop_footer
                %s641 = sadd.s32 1, %s637
              $region54: #{trans_conv.1} parent=47 // loop_footer_branch
                %636 = sbr.rel target = $region50
              $region55: #{trans_conv.1} parent=47 // loop_exit
                _
            $region48: #{trans_conv.1} parent=39 // pred_fallthru
              _
          $region40: #{trans_conv.1} parent=35 // pred_fallthru
            _
          %784 = vnop
        $region36: #{trans_conv.1} parent=31 // pred_fallthru
          _
      $region32: #{trans_conv.1} parent=5 // pred_fallthru
        _
      %p785 = scmp.le.s32.totalorder 2, %s9
      // Predicated region
      $region71: #{trans_conv.1} parent=5 // pred_check
        %p786 = pneg %p785
      $region72: #{trans_conv.1} parent=5 // pred_check_branch
        %788 = sbr.rel (%p786) target = $region74
      $region73: #{trans_conv.1} parent=5 // pred_region
        %s789 = ssub.s32 %s9, 2
        // Predicated region
        $region75: #{trans_conv.1} parent=73 // pred_check
          %p790 = pneg %p120
        $region76: #{trans_conv.1} parent=73 // pred_check_branch
          %792 = sbr.rel (%p790) target = $region78
        $region77: #{trans_conv.1} parent=73 // pred_region
          %s793 = sand.u32 %s105, 1
          %s794 = sand.u32 %s105, 1
          %s795 = smul.addr %s794, 256
          %s796 = scalar_lea.vmem [#allocation2], %s795
        $region78: #{trans_conv.1} parent=73 // pred_fallthru
          _
      $region74: #{trans_conv.1} parent=5 // pred_fallthru
        _
    $region6: #{trans_conv.1} parent=1 // loop_footer
      %s13 = sadd.s32 1, %s9
    $region7: #{trans_conv.1} parent=1 // loop_footer_branch
      %8 = sbr.rel target = $region3
    $region8: #{trans_conv.1} parent=1 // loop_exit
      _

</llo_original>
